<compile_context>
chip_gen: v6e
topology: v6e:2x2x1
jax: 0.10.0
libtpu: 0.0.40
codegen_flags: <defaults>
</compile_context>

<pallas_src>
import jax
import jax.numpy as jnp
from jax.experimental import pallas as pl
from jax.experimental.pallas import tpu as pltpu


# ---------------------------------------------------------------------------
# Kernel
# ---------------------------------------------------------------------------
def _make_kernel(IN, OUT):
    """Kernel over flattened input; weights arrive packed in one array."""

    def kernel(x_ref, w_ref, o_ref):
        # x_ref : (TB, IN)              flattened input tile
        # w_ref : (3*IN + 8, W)         packed [w1 | w2 | w3 | b1(+pad)] rows
        # o_ref : (TB, OUT)
        x = x_ref[...]

        w1 = w_ref[0:IN, 0:IN]                      # (IN, IN)   stored (in, out)
        w2 = w_ref[IN:2 * IN, 0:IN]                 # (IN, IN)
        w3 = w_ref[2 * IN:3 * IN, 0:OUT]            # (IN, OUT)
        b1 = w_ref[3 * IN:3 * IN + 1, 0:IN]         # (1, IN)

        h = jnp.dot(x, w1, preferred_element_type=jnp.float32) + b1
        h = jnp.maximum(h, 0.0)                     # ReLU (Dropout = identity, eval)
        h = jnp.dot(h, w2, preferred_element_type=jnp.float32)
        h = jnp.maximum(h, 0.0)                     # ReLU
        y = jnp.dot(h, w3, preferred_element_type=jnp.float32)

        o_ref[...] = y.astype(o_ref.dtype)

    return kernel


# ---------------------------------------------------------------------------
# Weight packing (do this ONCE; the packed array is what the kernel consumes)
# ---------------------------------------------------------------------------
def pack_params(w1, b1, w2, w3):
    """Pack [w1 | w2 | w3 | b1 (padded to 8 rows)] into a single f32 array so the
    kernel needs exactly one weight DMA instead of four."""
    IN = w1.shape[0]
    OUT = w3.shape[1]
    W = max(IN, OUT)
    rows = 3 * IN + 8
    packed = jnp.zeros((rows, W), jnp.float32)
    packed = packed.at[0:IN, 0:IN].set(w1.astype(jnp.float32))
    packed = packed.at[IN:2 * IN, 0:IN].set(w2.astype(jnp.float32))
    packed = packed.at[2 * IN:3 * IN, 0:OUT].set(w3.astype(jnp.float32))
    packed = packed.at[3 * IN:3 * IN + 1, 0:IN].set(b1.astype(jnp.float32))
    return packed


# ---------------------------------------------------------------------------
# Forward wrapper
# ---------------------------------------------------------------------------
def bigmlp_forward(x, packed, out_features, *, max_rows_per_call=1024):
    """x: (batch, seq_len=4, dim); packed: pack_params(w1, b1, w2, w3);
    out_features = seq_len * word_embed_size.
    Returns (batch, seq_len, word_embed_size)."""
    B, S, D = x.shape
    IN = S * D
    OUT = out_features
    assert packed.shape[0] == 3 * IN + 8
    assert packed.shape[1] >= max(IN, OUT)
    assert OUT % S == 0

    x_flat = x.reshape(B, IN)          # free contiguous reshape (== torch .view)
    kernel = _make_kernel(IN, OUT)

    cost = pl.CostEstimate(
        flops=2 * B * (IN * IN + IN * IN + IN * OUT),
        bytes_accessed=4 * (B * IN + B * OUT + packed.shape[0] * packed.shape[1]),
        transcendentals=0,
    )

    if B <= max_rows_per_call:
        # Small / per-step batch: single invocation, no grid, whole arrays resident
        # in VMEM -> one DMA per array, zero per-step grid overhead.
        vmem = pl.BlockSpec(memory_space=pltpu.MemorySpace.VMEM)
        out_flat = pl.pallas_call(
            kernel,
            out_shape=jax.ShapeDtypeStruct((B, OUT), jnp.float32),
            in_specs=[vmem, vmem],
            out_specs=vmem,
            cost_estimate=cost,
        )(x_flat, packed)
        return out_flat.reshape(B, S, OUT // S)

    # Large batch: grid over batch tiles; constant index_map keeps the packed
    # weights VMEM-resident (single DMA) across all tiles; "parallel" lets v7x
    # shard the tiles over both TensorCores.
    TILE_B = max_rows_per_call
    pad = (-B) % TILE_B
    if pad:
        x_flat = jnp.pad(x_flat, ((0, pad), (0, 0)))
    Bp = B + pad

    out_flat = pl.pallas_call(
        kernel,
        out_shape=jax.ShapeDtypeStruct((Bp, OUT), jnp.float32),
        grid=(Bp // TILE_B,),
        in_specs=[
            pl.BlockSpec((TILE_B, IN), lambda i: (i, 0)),
            pl.BlockSpec(packed.shape, lambda i: (0, 0)),   # weights: constant block
        ],
        out_specs=pl.BlockSpec((TILE_B, OUT), lambda i: (i, 0)),
        cost_estimate=cost,
        compiler_params=pltpu.CompilerParams(dimension_semantics=("parallel",)),
    )(x_flat, packed)
    return out_flat[:B].reshape(B, S, OUT // S)


# ---------------------------------------------------------------------------
# Init + pure-JAX reference
# ---------------------------------------------------------------------------
def init_params(key, seq_len, dim, word_embed_size):
    """Mirror the PyTorch init: all Linear weights ~ N(0, 0.01); the first layer's
    bias keeps nn.Linear's default U(-1/sqrt(fan_in), 1/sqrt(fan_in)).
    Weights are generated directly in the (in, out) layout the kernel expects."""
    IN = seq_len * dim
    OUT = seq_len * word_embed_size
    k1, k2, k3, kb = jax.random.split(key, 4)
    std = 0.01
    bound = 1.0 / jnp.sqrt(jnp.float32(IN))
    w1 = std * jax.random.normal(k1, (IN, IN), jnp.float32)
    w2 = std * jax.random.normal(k2, (IN, IN), jnp.float32)
    w3 = std * jax.random.normal(k3, (IN, OUT), jnp.float32)
    b1 = jax.random.uniform(kb, (1, IN), jnp.float32, minval=-bound, maxval=bound)
    return w1, b1, w2, w3


def reference_forward(x, w1, b1, w2, w3):
    B, S, D = x.shape
    xf = x.reshape(B, S * D)
    h = jnp.maximum(xf @ w1 + b1, 0.0)
    h = jnp.maximum(h @ w2, 0.0)
    y = h @ w3
    return y.reshape(B, S, -1)


if __name__ == "__main__":
    seq_len = 4            # fixed inside BigMLP.__init__
    dim = 32               # per-position input size  -> IN  = 128 (lane-dense)
    word_embed_size = 32   # per-position output size -> OUT = 128 (lane-dense)
    OUT = seq_len * word_embed_size

    key = jax.random.PRNGKey(0)
    kx, kp, kx2 = jax.random.split(key, 3)
    w1, b1, w2, w3 = init_params(kp, seq_len, dim, word_embed_size)
    packed = pack_params(w1, b1, w2, w3)   # pack ONCE, reuse across calls

    # ---- Path 1: small per-step batch (no grid, single VMEM-resident call) ----
    batch = 8
    x = jax.random.normal(kx, (batch, seq_len, dim), jnp.float32)
    out = jax.block_until_ready(bigmlp_forward(x, packed, OUT))
    ref = reference_forward(x, w1, b1, w2, w3)
    assert out.shape == (batch, seq_len, word_embed_size)
    assert jnp.allclose(out, ref, atol=2e-5, rtol=1e-2)

    # ---- Path 2: amortized batched path (grid over batch tiles, resident weights) ----
    batch2 = 20            # small, but forces the grid path (tile=8 -> pad to 24, 3 steps)
    x2 = jax.random.normal(kx2, (batch2, seq_len, dim), jnp.float32)
    out2 = jax.block_until_ready(
        bigmlp_forward(x2, packed, OUT, max_rows_per_call=8))
    ref2 = reference_forward(x2, w1, b1, w2, w3)
    assert out2.shape == (batch2, seq_len, word_embed_size)
    assert jnp.allclose(out2, ref2, atol=2e-5, rtol=1e-2)

    print("KERNEL_OK")
</pallas_src>

<mosaic_0001>
module attributes {stable_mosaic.version = 11 : i64} {
  func.func @kernel(%arg0: memref<8x128xf32, #tpu.memory_space<vmem>>, %arg1: memref<392x128xf32, #tpu.memory_space<vmem>>, %arg2: memref<8x128xf32, #tpu.memory_space<vmem>>) attributes {dimension_semantics = [], scalar_prefetch = 0 : i64, scratch_operands = 0 : i64, tpu.core_type = #tpu.core_type<tc>} {
    %c0 = arith.constant 0 : index
    %c0_0 = arith.constant 0 : index
    %0 = vector.load %arg0[%c0, %c0_0] : memref<8x128xf32, #tpu.memory_space<vmem>>, vector<8x128xf32>
    %c0_1 = arith.constant 0 : index
    %c0_2 = arith.constant 0 : index
    %1 = vector.load %arg1[%c0_1, %c0_2] : memref<392x128xf32, #tpu.memory_space<vmem>>, vector<128x128xf32>
    %c128 = arith.constant 128 : index
    %c0_3 = arith.constant 0 : index
    %2 = vector.load %arg1[%c128, %c0_3] : memref<392x128xf32, #tpu.memory_space<vmem>>, vector<128x128xf32>
    %c256 = arith.constant 256 : index
    %c0_4 = arith.constant 0 : index
    %3 = vector.load %arg1[%c256, %c0_4] : memref<392x128xf32, #tpu.memory_space<vmem>>, vector<128x128xf32>
    %c384 = arith.constant 384 : index
    %c0_5 = arith.constant 0 : index
    %4 = vector.load %arg1[%c384, %c0_5] : memref<392x128xf32, #tpu.memory_space<vmem>>, vector<1x128xf32>
    %cst = arith.constant dense<0.000000e+00> : vector<8x128xf32>
    %5 = tpu.matmul %0, %1, %cst {dimension_numbers = #tpu.dot_dimension_numbers<[1], [0], [0], [1], [0, 0, 1, 1], [], []>} : vector<8x128xf32>, vector<128x128xf32>, vector<8x128xf32> -> vector<8x128xf32>
    %6 = vector.broadcast %4 : vector<1x128xf32> to vector<8x128xf32>
    %7 = arith.addf %5, %6 : vector<8x128xf32>
    %cst_6 = arith.constant 0.000000e+00 : f32
    %8 = vector.broadcast %cst_6 : f32 to vector<8x128xf32>
    %9 = arith.maximumf %7, %8 : vector<8x128xf32>
    %cst_7 = arith.constant dense<0.000000e+00> : vector<8x128xf32>
    %10 = tpu.matmul %9, %2, %cst_7 {dimension_numbers = #tpu.dot_dimension_numbers<[1], [0], [0], [1], [0, 0, 1, 1], [], []>} : vector<8x128xf32>, vector<128x128xf32>, vector<8x128xf32> -> vector<8x128xf32>
    %cst_8 = arith.constant 0.000000e+00 : f32
    %11 = vector.broadcast %cst_8 : f32 to vector<8x128xf32>
    %12 = arith.maximumf %10, %11 : vector<8x128xf32>
    %cst_9 = arith.constant dense<0.000000e+00> : vector<8x128xf32>
    %13 = tpu.matmul %12, %3, %cst_9 {dimension_numbers = #tpu.dot_dimension_numbers<[1], [0], [0], [1], [0, 0, 1, 1], [], []>} : vector<8x128xf32>, vector<128x128xf32>, vector<8x128xf32> -> vector<8x128xf32>
    %c0_10 = arith.constant 0 : index
    %c0_11 = arith.constant 0 : index
    %14 = vector.load %arg2[%c0_10, %c0_11] : memref<8x128xf32, #tpu.memory_space<vmem>>, vector<8x128xf32>
    tpu.vector_store %arg2[%c0_10, %c0_11], %13 {strides = array<i32>} : memref<8x128xf32, #tpu.memory_space<vmem>>, vector<8x128xf32>,
    return
  }
}

</mosaic_0001>

<llo_original>
// kernel: tpu_custom_call.1
$region0: #{tpu_custom_call.1}
  #allocation0 [shape = 'u32[]', space=smem, size = 0x4, offset = 0x4, fixed_abs, tag = 'smem constant byte address 0x4 - core index']
  #allocation1 [shape = 'u32[144,128]{1,0:T(1,128)}', space=vmem, size = 0x12000, scoped, tag = 'internal scratch']
  %s0 = inlined_call_operand.hbm [shape: f32[8,128], index: 0, kind: input, shape index: {}]
  %s1 = inlined_call_operand.hbm [shape: f32[392,128], index: 1, kind: input, shape index: {}]
  %s2 = inlined_call_operand.hbm [shape: f32[8,128], index: 2, kind: output, shape index: {}]
  %s3 = sld [smem:[#allocation0]]
  $region26: #{tpu_custom_call.1} parent=0
    _
  %s5 = ssub.s32 1, %s3
  %s6 = scalar_select 0, %s5, %s3
  $region1: #{tpu_custom_call.1} parent=0
    #allocation2 [shape = 'u8[4096]{0}', space=vmem, size = 0x1000, scoped, tag = 'input window, operand 0, single buffered']
    #allocation3 [shape = 's32[1]{0}', space=sflag, size = 0x4, scoped, tag = 'scoped memory for tpu_custom_call.1']
    #allocation4 [shape = 's32[1]{0}', space=sflag, size = 0x4, scoped, tag = 'scoped memory for tpu_custom_call.1']
    #allocation5 [shape = 'u8[200704]{0}', space=vmem, size = 0x31000, scoped, tag = 'input window, operand 1, single buffered']
    #allocation6 [shape = 's32[1]{0}', space=sflag, size = 0x4, scoped, tag = 'scoped memory for tpu_custom_call.1']
    #allocation7 [shape = 'u8[4096]{0}', space=vmem, size = 0x1000, scoped, tag = 'output window, operand 0, single buffered']
    %7 = vsyncpa [#allocation3], 0
    %8 = vsyncpa [#allocation6], 0
    %9 = vsyncpa [#allocation4], 0
    // Predicated region
    $region2: #{tpu_custom_call.1} parent=1 // pred_check
      _
    $region3: #{tpu_custom_call.1} parent=1 // pred_check_branch
      %11 = sbr.rel (0) target = $region5
    $region4: #{tpu_custom_call.1} parent=1 // pred_region
      %s13 = ssub.s32 128, 128
      %14 = vsyncadd [#allocation3], %s13
      %s16 = sshll.u32 [#allocation2], 4
      %s17 = int_to_ptr.vmem [resolvable:$true] %s16
      %19 = dma.hbm_to_vmem [thread:$0]  %s0, 128, %s17, [#allocation3]
    $region5: #{tpu_custom_call.1} parent=1 // pred_fallthru
      _
    // Predicated region
    $region6: #{tpu_custom_call.1} parent=1 // pred_check
      _
    $region7: #{tpu_custom_call.1} parent=1 // pred_check_branch
      %21 = sbr.rel (0) target = $region9
    $region8: #{tpu_custom_call.1} parent=1 // pred_region
      %s23 = ssub.s32 6272, 6272
      %24 = vsyncadd [#allocation6], %s23
      %s25 = sshll.u32 [#allocation5], 4
      %s26 = int_to_ptr.vmem [resolvable:$true] %s25
      %31 = dma.hbm_to_vmem [thread:$0]  %s1, 6272, %s26, [#allocation6], 128, 128, 8
    $region9: #{tpu_custom_call.1} parent=1 // pred_fallthru
      _
    // Predicated region
    $region10: #{tpu_custom_call.1} parent=1 // pred_check
      _
    $region11: #{tpu_custom_call.1} parent=1 // pred_check_branch
      %33 = sbr.rel (0) target = $region13
    $region12: #{tpu_custom_call.1} parent=1 // pred_region
      %34 = dma.done [#allocation3], 128
    $region13: #{tpu_custom_call.1} parent=1 // pred_fallthru
      _
    // Predicated region
    $region14: #{tpu_custom_call.1} parent=1 // pred_check
      _
    $region15: #{tpu_custom_call.1} parent=1 // pred_check_branch
      %36 = sbr.rel (0) target = $region17
    $region16: #{tpu_custom_call.1} parent=1 // pred_region
      %37 = dma.done [#allocation6], 6272
    $region17: #{tpu_custom_call.1} parent=1 // pred_fallthru
      _
    %v38 = vld [vmem:[#allocation2] sm:$0xff]
    %v39 = vld [vmem:[#allocation5] sm:$0xff]
    %v40 = vld [vmem:[#allocation5 + $0x8] sm:$0xff]
    %v41 = vld [vmem:[#allocation5 + $0x10] sm:$0xff]
    %v42 = vld [vmem:[#allocation5 + $0x18] sm:$0xff]
    %v43 = vld [vmem:[#allocation5 + $0x20] sm:$0xff]
    %v44 = vld [vmem:[#allocation5 + $0x28] sm:$0xff]
    %v45 = vld [vmem:[#allocation5 + $0x30] sm:$0xff]
    %v46 = vld [vmem:[#allocation5 + $0x38] sm:$0xff]
    %v47 = vld [vmem:[#allocation5 + $0x40] sm:$0xff]
    %v48 = vld [vmem:[#allocation5 + $0x48] sm:$0xff]
    %v49 = vld [vmem:[#allocation5 + $0x50] sm:$0xff]
    %v50 = vld [vmem:[#allocation5 + $0x58] sm:$0xff]
    %v51 = vld [vmem:[#allocation5 + $0x60] sm:$0xff]
    %v52 = vld [vmem:[#allocation5 + $0x68] sm:$0xff]
    %v53 = vld [vmem:[#allocation5 + $0x70] sm:$0xff]
    %v54 = vld [vmem:[#allocation5 + $0x78] sm:$0xff]
    %v55 = vld [vmem:[#allocation5 + $0x80] sm:$0xff]
    %v56 = vld [vmem:[#allocation5 + $0x88] sm:$0xff]
    %v57 = vld [vmem:[#allocation5 + $0x90] sm:$0xff]
    %v58 = vld [vmem:[#allocation5 + $0x98] sm:$0xff]
    %v59 = vld [vmem:[#allocation5 + $0xa0] sm:$0xff]
    %v60 = vld [vmem:[#allocation5 + $0xa8] sm:$0xff]
    %v61 = vld [vmem:[#allocation5 + $0xb0] sm:$0xff]
    %v62 = vld [vmem:[#allocation5 + $0xb8] sm:$0xff]
    %v63 = vld [vmem:[#allocation5 + $0xc0] sm:$0xff]
    %v64 = vld [vmem:[#allocation5 + $0xc8] sm:$0xff]
    %v65 = vld [vmem:[#allocation5 + $0xd0] sm:$0xff]
    %v66 = vld [vmem:[#allocation5 + $0xd8] sm:$0xff]
    %v67 = vld [vmem:[#allocation5 + $0xe0] sm:$0xff]
    %v68 = vld [vmem:[#allocation5 + $0xe8] sm:$0xff]
    %v69 = vld [vmem:[#allocation5 + $0xf0] sm:$0xff]
    %v70 = vld [vmem:[#allocation5 + $0xf8] sm:$0xff]
    %v71 = vld [vmem:[#allocation5 + $0x100] sm:$0xff]
    %v72 = vld [vmem:[#allocation5 + $0x108] sm:$0xff]
    %v73 = vld [vmem:[#allocation5 + $0x110] sm:$0xff]
    %v74 = vld [vmem:[#allocation5 + $0x118] sm:$0xff]
    %v75 = vld [vmem:[#allocation5 + $0x120] sm:$0xff]
    %v76 = vld [vmem:[#allocation5 + $0x128] sm:$0xff]
    %v77 = vld [vmem:[#allocation5 + $0x130] sm:$0xff]
    %v78 = vld [vmem:[#allocation5 + $0x138] sm:$0xff]
    %v79 = vld [vmem:[#allocation5 + $0x140] sm:$0xff]
    %v80 = vld [vmem:[#allocation5 + $0x148] sm:$0xff]
    %v81 = vld [vmem:[#allocation5 + $0x150] sm:$0xff]
    %v82 = vld [vmem:[#allocation5 + $0x158] sm:$0xff]
    %v83 = vld [vmem:[#allocation5 + $0x160] sm:$0xff]
    %v84 = vld [vmem:[#allocation5 + $0x168] sm:$0xff]
    %v85 = vld [vmem:[#allocation5 + $0x170] sm:$0xff]
    %v86 = vld [vmem:[#allocation5 + $0x178] sm:$0xff]
    %v87 = vld [vmem:[#allocation5 + $0x180] sm:$0x1]
    %v88 = vlaneseq
    %v89 = vshrl.u32 %v88, 7
    %v90 = vsub.s32 0, %v89
    %v91 = vrot.slane %v87, %v90
    %92 = vmatprep.subr.mxu0 0.0
    %93 = vmatpush1.msra.mxu0 %v54
    %94 = vmatprep.subr.mxu0 0.0
    %95 = vmatpush1.msra.mxu0 %v53
    %96 = vmatprep.subr.mxu0 0.0
    %97 = vmatpush1.msra.mxu0 %v52
    %98 = vmatprep.subr.mxu0 0.0
    %99 = vmatpush1.msra.mxu0 %v51
    %100 = vmatprep.subr.mxu0 0.0
    %101 = vmatpush1.msra.mxu0 %v50
    %102 = vmatprep.subr.mxu0 0.0
    %103 = vmatpush1.msra.mxu0 %v49
    %104 = vmatprep.subr.mxu0 0.0
    %105 = vmatpush1.msra.mxu0 %v48
    %106 = vmatprep.subr.mxu0 0.0
    %107 = vmatpush1.msra.mxu0 %v47
    %108 = vmatprep.subr.mxu0 0.0
    %109 = vmatpush1.msra.mxu0 %v46
    %110 = vmatprep.subr.mxu0 0.0
    %111 = vmatpush1.msra.mxu0 %v45
    %112 = vmatprep.subr.mxu0 0.0
    %113 = vmatpush1.msra.mxu0 %v44
    %114 = vmatprep.subr.mxu0 0.0
    %115 = vmatpush1.msra.mxu0 %v43
    %116 = vmatprep.subr.mxu0 0.0
    %117 = vmatpush1.msra.mxu0 %v42
    %118 = vmatprep.subr.mxu0 0.0
    %119 = vmatpush1.msra.mxu0 %v41
    %120 = vmatprep.subr.mxu0 0.0
    %121 = vmatpush1.msra.mxu0 %v40
    %122 = vmatprep.subr.mxu0 0.0
    %123 = vmatpush1.msra.mxu0 %v39
    %124 = vmatprep.subr.mxu0 0.0
    %125 = vmatpush2.msra.mxu0 0.0
    %126 = vmatprep.subr.mxu0 0.0
    %127 = vmatpush2.msra.mxu0 0.0
    %128 = vmatprep.subr.mxu0 0.0
    %129 = vmatpush2.msra.mxu0 0.0
    %130 = vmatprep.subr.mxu0 0.0
    %131 = vmatpush2.msra.mxu0 0.0
    %132 = vmatprep.subr.mxu0 0.0
    %133 = vmatpush2.msra.mxu0 0.0
    %134 = vmatprep.subr.mxu0 0.0
    %135 = vmatpush2.msra.mxu0 0.0
    %136 = vmatprep.subr.mxu0 0.0
    %137 = vmatpush2.msra.mxu0 0.0
    %138 = vmatprep.subr.mxu0 0.0
    %139 = vmatpush2.msra.mxu0 0.0
    %140 = vmatprep.subr.mxu0 0.0
    %141 = vmatpush2.msra.mxu0 0.0
    %142 = vmatprep.subr.mxu0 0.0
    %143 = vmatpush2.msra.mxu0 0.0
    %144 = vmatprep.subr.mxu0 0.0
    %145 = vmatpush2.msra.mxu0 0.0
    %146 = vmatprep.subr.mxu0 0.0
    %147 = vmatpush2.msra.mxu0 0.0
    %148 = vmatprep.subr.mxu0 0.0
    %149 = vmatpush2.msra.mxu0 0.0
    %150 = vmatprep.subr.mxu0 0.0
    %151 = vmatpush2.msra.mxu0 0.0
    %152 = vmatprep.subr.mxu0 0.0
    %153 = vmatpush2.msra.mxu0 0.0
    %154 = vmatprep.subr.mxu0 0.0
    %155 = vmatpush2.msra.mxu0 0.0
    %156 = vmatprep.mubr.f32.mxu0 0.0
    %157 = vmatmul.mubr.f32.gmra.mxu0 %v38
    %v158 = vpop.f32.mrf.mxu0
    %v159 = vadd.f32 %v91, %v158
    %v160 = vpop.f32.mrf.mxu0
    %161 = vdwg.mxu0
    %v162 = vmax.f32 %v159, 0.0
    %163 = vmatprep.subr.mxu0 0.0
    %164 = vmatpush1.msra.mxu0 %v70
    %165 = vmatprep.subr.mxu0 0.0
    %166 = vmatpush1.msra.mxu0 %v69
    %167 = vmatprep.subr.mxu0 0.0
    %168 = vmatpush1.msra.mxu0 %v68
    %169 = vmatprep.subr.mxu0 0.0
    %170 = vmatpush1.msra.mxu0 %v67
    %171 = vmatprep.subr.mxu0 0.0
    %172 = vmatpush1.msra.mxu0 %v66
    %173 = vmatprep.subr.mxu0 0.0
    %174 = vmatpush1.msra.mxu0 %v65
    %175 = vmatprep.subr.mxu0 0.0
    %176 = vmatpush1.msra.mxu0 %v64
    %177 = vmatprep.subr.mxu0 0.0
    %178 = vmatpush1.msra.mxu0 %v63
    %179 = vmatprep.subr.mxu0 0.0
    %180 = vmatpush1.msra.mxu0 %v62
    %181 = vmatprep.subr.mxu0 0.0
    %182 = vmatpush1.msra.mxu0 %v61
    %183 = vmatprep.subr.mxu0 0.0
    %184 = vmatpush1.msra.mxu0 %v60
    %185 = vmatprep.subr.mxu0 0.0
    %186 = vmatpush1.msra.mxu0 %v59
    %187 = vmatprep.subr.mxu0 0.0
    %188 = vmatpush1.msra.mxu0 %v58
    %189 = vmatprep.subr.mxu0 0.0
    %190 = vmatpush1.msra.mxu0 %v57
    %191 = vmatprep.subr.mxu0 0.0
    %192 = vmatpush1.msra.mxu0 %v56
    %193 = vmatprep.subr.mxu0 0.0
    %194 = vmatpush1.msra.mxu0 %v55
    %195 = vmatprep.subr.mxu0 0.0
    %196 = vmatpush2.msra.mxu0 0.0
    %197 = vmatprep.subr.mxu0 0.0
    %198 = vmatpush2.msra.mxu0 0.0
    %199 = vmatprep.subr.mxu0 0.0
    %200 = vmatpush2.msra.mxu0 0.0
    %201 = vmatprep.subr.mxu0 0.0
    %202 = vmatpush2.msra.mxu0 0.0
    %203 = vmatprep.subr.mxu0 0.0
    %204 = vmatpush2.msra.mxu0 0.0
    %205 = vmatprep.subr.mxu0 0.0
    %206 = vmatpush2.msra.mxu0 0.0
    %207 = vmatprep.subr.mxu0 0.0
    %208 = vmatpush2.msra.mxu0 0.0
    %209 = vmatprep.subr.mxu0 0.0
    %210 = vmatpush2.msra.mxu0 0.0
    %211 = vmatprep.subr.mxu0 0.0
    %212 = vmatpush2.msra.mxu0 0.0
    %213 = vmatprep.subr.mxu0 0.0
    %214 = vmatpush2.msra.mxu0 0.0
    %215 = vmatprep.subr.mxu0 0.0
    %216 = vmatpush2.msra.mxu0 0.0
    %217 = vmatprep.subr.mxu0 0.0
    %218 = vmatpush2.msra.mxu0 0.0
    %219 = vmatprep.subr.mxu0 0.0
    %220 = vmatpush2.msra.mxu0 0.0
    %221 = vmatprep.subr.mxu0 0.0
    %222 = vmatpush2.msra.mxu0 0.0
    %223 = vmatprep.subr.mxu0 0.0
    %224 = vmatpush2.msra.mxu0 0.0
    %225 = vmatprep.subr.mxu0 0.0
    %226 = vmatpush2.msra.mxu0 0.0
    %227 = vmatprep.mubr.f32.mxu0 0.0
    %228 = vmatmul.mubr.f32.gmra.mxu0 %v162
    %v229 = vpop.f32.mrf.mxu0
    %v230 = vadd.f32 0.0, %v229
    %v231 = vpop.f32.mrf.mxu0
    %232 = vdwg.mxu0
    %v233 = vmax.f32 %v230, 0.0
    %234 = vmatprep.subr.mxu0 0.0
    %235 = vmatpush1.msra.mxu0 %v86
    %236 = vmatprep.subr.mxu0 0.0
    %237 = vmatpush1.msra.mxu0 %v85
    %238 = vmatprep.subr.mxu0 0.0
    %239 = vmatpush1.msra.mxu0 %v84
    %240 = vmatprep.subr.mxu0 0.0
    %241 = vmatpush1.msra.mxu0 %v83
    %242 = vmatprep.subr.mxu0 0.0
    %243 = vmatpush1.msra.mxu0 %v82
    %244 = vmatprep.subr.mxu0 0.0
    %245 = vmatpush1.msra.mxu0 %v81
    %246 = vmatprep.subr.mxu0 0.0
    %247 = vmatpush1.msra.mxu0 %v80
    %248 = vmatprep.subr.mxu0 0.0
    %249 = vmatpush1.msra.mxu0 %v79
    %250 = vmatprep.subr.mxu0 0.0
    %251 = vmatpush1.msra.mxu0 %v78
    %252 = vmatprep.subr.mxu0 0.0
    %253 = vmatpush1.msra.mxu0 %v77
    %254 = vmatprep.subr.mxu0 0.0
    %255 = vmatpush1.msra.mxu0 %v76
    %256 = vmatprep.subr.mxu0 0.0
    %257 = vmatpush1.msra.mxu0 %v75
    %258 = vmatprep.subr.mxu0 0.0
    %259 = vmatpush1.msra.mxu0 %v74
    %260 = vmatprep.subr.mxu0 0.0
    %261 = vmatpush1.msra.mxu0 %v73
    %262 = vmatprep.subr.mxu0 0.0
    %263 = vmatpush1.msra.mxu0 %v72
    %264 = vmatprep.subr.mxu0 0.0
    %265 = vmatpush1.msra.mxu0 %v71
    %266 = vmatprep.subr.mxu0 0.0
    %267 = vmatpush2.msra.mxu0 0.0
    %268 = vmatprep.subr.mxu0 0.0
    %269 = vmatpush2.msra.mxu0 0.0
    %270 = vmatprep.subr.mxu0 0.0
    %271 = vmatpush2.msra.mxu0 0.0
    %272 = vmatprep.subr.mxu0 0.0
    %273 = vmatpush2.msra.mxu0 0.0
    %274 = vmatprep.subr.mxu0 0.0
    %275 = vmatpush2.msra.mxu0 0.0
    %276 = vmatprep.subr.mxu0 0.0
    %277 = vmatpush2.msra.mxu0 0.0
    %278 = vmatprep.subr.mxu0 0.0
    %279 = vmatpush2.msra.mxu0 0.0
    %280 = vmatprep.subr.mxu0 0.0
    %281 = vmatpush2.msra.mxu0 0.0
    %282 = vmatprep.subr.mxu0 0.0
    %283 = vmatpush2.msra.mxu0 0.0
    %284 = vmatprep.subr.mxu0 0.0
    %285 = vmatpush2.msra.mxu0 0.0
    %286 = vmatprep.subr.mxu0 0.0
    %287 = vmatpush2.msra.mxu0 0.0
    %288 = vmatprep.subr.mxu0 0.0
    %289 = vmatpush2.msra.mxu0 0.0
    %290 = vmatprep.subr.mxu0 0.0
    %291 = vmatpush2.msra.mxu0 0.0
    %292 = vmatprep.subr.mxu0 0.0
    %293 = vmatpush2.msra.mxu0 0.0
    %294 = vmatprep.subr.mxu0 0.0
    %295 = vmatpush2.msra.mxu0 0.0
    %296 = vmatprep.subr.mxu0 0.0
    %297 = vmatpush2.msra.mxu0 0.0
    %298 = vmatprep.mubr.f32.mxu0 0.0
    %299 = vmatmul.mubr.f32.gmra.mxu0 %v233
    %v300 = vpop.f32.mrf.mxu0
    %v301 = vadd.f32 0.0, %v300
    %v302 = vpop.f32.mrf.mxu0
    %303 = vdwg.mxu0
    %304 = vst [vmem:[#allocation7] sm:$0xff] %v301
    // Predicated region
    $region18: #{tpu_custom_call.1} parent=1 // pred_check
      _
    $region19: #{tpu_custom_call.1} parent=1 // pred_check_branch
      %306 = sbr.rel (0) target = $region21
    $region20: #{tpu_custom_call.1} parent=1 // pred_region
      %s308 = ssub.s32 128, 128
      %309 = vsyncadd [#allocation4], %s308
      %s311 = sshll.u32 [#allocation7], 4
      %s312 = int_to_ptr.vmem [resolvable:$true] %s311
      %314 = dma.vmem_to_hbm [thread:$0]  %s312, 128, %s2, [#allocation4]
    $region21: #{tpu_custom_call.1} parent=1 // pred_fallthru
      _
    // Predicated region
    $region22: #{tpu_custom_call.1} parent=1 // pred_check
      _
    $region23: #{tpu_custom_call.1} parent=1 // pred_check_branch
      %316 = sbr.rel (0) target = $region25
    $region24: #{tpu_custom_call.1} parent=1 // pred_region
      %317 = dma.done [#allocation4], 128
    $region25: #{tpu_custom_call.1} parent=1 // pred_fallthru
      _
    %318 = vsyncpa [#allocation3], 1
    %319 = vsyncpa [#allocation6], 1
    %320 = vsyncpa [#allocation4], 1

</llo_original>
